<compile_context>
chip_gen: v5e
topology: v5e:2x2
jax: 0.10.0
libtpu: 0.0.40
codegen_flags: <defaults>
</compile_context>

<pallas_src>
import numpy as np
import jax
import jax.numpy as jnp
from jax import lax
from jax.experimental import pallas as pl
from jax.experimental.pallas import tpu as pltpu

# Model geometry implied by fc1 = Linear(20*6*3, 32): input is (B, 1, 6, 3).
H, W = 6, 3
C_IN, C1, C2 = 1, 10, 20
FC1_OUT, N_CLASSES = 32, 4

D_IN = C_IN * H * W            # 18
D1 = C1 * H * W                # 180
D2 = C2 * H * W                # 360


def _round_up(n, m):
    return ((n + m - 1) // m) * m


# Lane-padded feature widths (multiples of 128) for lane-dense vregs / stores.
D1P = _round_up(D1, 128)          # 256
D2P = _round_up(D2, 128)          # 384
D3P = _round_up(FC1_OUT, 128)     # 128
D4P = _round_up(N_CLASSES, 128)   # 128


def conv3x3_same_as_matrix(w):
    """Fold a 3x3, padding=1 conv (OIHW weights) into a dense matrix.

    Returns M of shape (Cin*H*W, Cout*H*W) such that for a flattened
    channel-major input x_flat (B, Cin*H*W): conv(x) flattened == x_flat @ M.
    """
    Cout, Cin, KH, KW = w.shape
    M = np.zeros((Cin * H * W, Cout * H * W), dtype=np.float32)
    for co in range(Cout):
        for ci in range(Cin):
            for i2 in range(H):
                for j2 in range(W):
                    for ky in range(KH):
                        for kx in range(KW):
                            i1, j1 = i2 + ky - 1, j2 + kx - 1
                            if 0 <= i1 < H and 0 <= j1 < W:
                                M[ci * H * W + i1 * W + j1,
                                  co * H * W + i2 * W + j2] += w[co, ci, ky, kx]
    return M


def forward_kernel(x_ref, m1_ref, b1_ref, m2_ref, b2_ref,
                   wf1_ref, bf1_ref, wf2_ref, bf2_ref, o_ref):
    # conv1 (as matmul, bf16 operands / f32 accumulate) + bias + ReLU (f32)
    h = jnp.dot(x_ref[...].astype(jnp.bfloat16), m1_ref[...],
                preferred_element_type=jnp.float32)
    h = jnp.maximum(h + b1_ref[...], 0.0)
    # conv2 (as matmul) + ReLU
    h = jnp.dot(h.astype(jnp.bfloat16), m2_ref[...],
                preferred_element_type=jnp.float32)
    h = jnp.maximum(h + b2_ref[...], 0.0)
    # fc1 + ReLU
    h = jnp.dot(h.astype(jnp.bfloat16), wf1_ref[...],
                preferred_element_type=jnp.float32)
    h = jnp.maximum(h + bf1_ref[...], 0.0)
    # fc2 + softmax(dim=1).  Padded classes carry a -1e30 bias -> exp() == 0.
    logits = jnp.dot(h.astype(jnp.bfloat16), wf2_ref[...],
                     preferred_element_type=jnp.float32) + bf2_ref[...]
    m = jnp.max(logits, axis=1, keepdims=True)
    e = jnp.exp(logits - m)
    inv = pl.reciprocal(jnp.sum(e, axis=1, keepdims=True), approx=True)
    o_ref[...] = e * inv


def adhd_forward(x, params, tile_b=1024):
    """x: (B, 1, 6, 3) float32 (NCHW). Returns softmax probabilities (B, 4)."""
    B = x.shape[0]
    x_flat = x.reshape(B, D_IN).astype(jnp.float32)

    # Batch tile: multiple of 8 sublanes, capped so tiny batches stay tiny.
    tb = min(tile_b, _round_up(B, 8))
    Bp = _round_up(B, tb)
    if Bp != B:
        x_flat = jnp.pad(x_flat, ((0, Bp - B), (0, 0)))

    x_spec = pl.BlockSpec((tb, D_IN), lambda i: (i, 0))
    out_spec = pl.BlockSpec((tb, D4P), lambda i: (i, 0))
    # Full-array blocks with constant index maps: weights stay VMEM-resident.
    w_specs = [pl.BlockSpec(p.shape, lambda i: (0, 0)) for p in params]

    weight_bytes = sum(int(np.prod(p.shape)) * p.dtype.itemsize for p in params)
    flops = 2 * Bp * (D_IN * D1P + D1P * D2P + D2P * D3P + D3P * D4P)
    cost = pl.CostEstimate(
        flops=flops,
        transcendentals=Bp * (D4P + 1),               # exp row + reciprocal
        bytes_accessed=Bp * D_IN * 4 + Bp * D4P * 4 + weight_bytes)

    out = pl.pallas_call(
        forward_kernel,
        out_shape=jax.ShapeDtypeStruct((Bp, D4P), jnp.float32),
        grid=(Bp // tb,),
        in_specs=[x_spec] + w_specs,
        out_specs=out_spec,
        compiler_params=pltpu.CompilerParams(
            dimension_semantics=("parallel",)),
        cost_estimate=cost,
    )(x_flat, *params)
    return out[:B, :N_CLASSES]


def init_params(key):
    """Deterministic synthetic parameters with PyTorch-like fan-in scaling."""
    ks = jax.random.split(key, 8)

    def u(k, shape, fan_in):
        bound = 1.0 / np.sqrt(fan_in)
        return jax.random.uniform(k, shape, jnp.float32, -bound, bound)

    w_conv1 = u(ks[0], (C1, C_IN, 3, 3), C_IN * 9)
    b_conv1 = u(ks[1], (C1,), C_IN * 9)
    w_conv2 = u(ks[2], (C2, C1, 3, 3), C1 * 9)
    b_conv2 = u(ks[3], (C2,), C1 * 9)
    w_fc1 = u(ks[4], (FC1_OUT, C2 * H * W), C2 * H * W)
    b_fc1 = u(ks[5], (FC1_OUT,), C2 * H * W)
    w_fc2 = u(ks[6], (N_CLASSES, FC1_OUT), FC1_OUT)
    b_fc2 = u(ks[7], (N_CLASSES,), FC1_OUT)
    return (w_conv1, b_conv1, w_conv2, b_conv2, w_fc1, b_fc1, w_fc2, b_fc2)


def fold_params(raw):
    """Fold conv/linear weights into lane-padded dense matrices for the kernel."""
    w_conv1, b_conv1, w_conv2, b_conv2, w_fc1, b_fc1, w_fc2, b_fc2 = [
        np.asarray(p, dtype=np.float32) for p in raw
    ]

    def pad2(a, rows, cols, fill=0.0):
        out = np.full((rows, cols), fill, dtype=np.float32)
        out[:a.shape[0], :a.shape[1]] = a
        return out

    m1 = pad2(conv3x3_same_as_matrix(w_conv1), D_IN, D1P)       # (18, 256)
    b1 = pad2(np.repeat(b_conv1, H * W)[None, :], 1, D1P)       # (1, 256)
    m2 = pad2(conv3x3_same_as_matrix(w_conv2), D1P, D2P)        # (256, 384)
    b2 = pad2(np.repeat(b_conv2, H * W)[None, :], 1, D2P)       # (1, 384)
    wf1 = pad2(w_fc1.T, D2P, D3P)                               # (384, 128)
    bf1 = pad2(b_fc1[None, :], 1, D3P)                          # (1, 128)
    wf2 = pad2(w_fc2.T, D3P, D4P)                               # (128, 128)
    # Padded class columns get a hugely negative bias so exp() of them is 0
    # and the softmax over the 4 real classes is exactly preserved.
    bf2 = pad2(b_fc2[None, :], 1, D4P, fill=-1e30)              # (1, 128)

    # Weights in bf16 (MXU), biases stay f32 (elementwise epilogue in f32).
    m1, m2, wf1, wf2 = (jnp.asarray(a, dtype=jnp.bfloat16)
                        for a in (m1, m2, wf1, wf2))
    b1, b2, bf1, bf2 = (jnp.asarray(a) for a in (b1, b2, bf1, bf2))
    return (m1, b1, m2, b2, wf1, bf1, wf2, bf2)


def reference_forward(x, raw):
    """Pure-JAX f32 reference mirroring the PyTorch module (independent of the fold)."""
    w_conv1, b_conv1, w_conv2, b_conv2, w_fc1, b_fc1, w_fc2, b_fc2 = raw
    dn = lax.conv_dimension_numbers(x.shape, w_conv1.shape, ("NCHW", "OIHW", "NCHW"))
    h = lax.conv_general_dilated(x, w_conv1, (1, 1), [(1, 1), (1, 1)], dimension_numbers=dn)
    h = jax.nn.relu(h + b_conv1[None, :, None, None])
    dn2 = lax.conv_dimension_numbers(h.shape, w_conv2.shape, ("NCHW", "OIHW", "NCHW"))
    h = lax.conv_general_dilated(h, w_conv2, (1, 1), [(1, 1), (1, 1)], dimension_numbers=dn2)
    h = jax.nn.relu(h + b_conv2[None, :, None, None])
    h = h.reshape(h.shape[0], -1)
    h = jax.nn.relu(h @ w_fc1.T + b_fc1)
    logits = h @ w_fc2.T + b_fc2
    return jax.nn.softmax(logits, axis=1)


if __name__ == "__main__":
    key = jax.random.PRNGKey(0)
    k_param, k_x = jax.random.split(key)

    raw_params = init_params(k_param)
    kernel_params = fold_params(raw_params)

    B = 2
    x = jax.random.normal(k_x, (B, C_IN, H, W), dtype=jnp.float32)

    out = adhd_forward(x, kernel_params)
    out = jax.block_until_ready(out)

    ref = reference_forward(x, raw_params)
    # bf16 weights + approximate reciprocal -> slightly looser tolerance than
    # the pure-f32 version (typical error is ~1e-3 on these probabilities).
    np.testing.assert_allclose(np.asarray(out), np.asarray(ref), atol=3e-2, rtol=3e-2)
    assert out.shape == (B, N_CLASSES)
    # Probabilities should still sum to ~1 per row.
    np.testing.assert_allclose(np.asarray(out).sum(axis=1), np.ones(B), atol=1e-2)

    print("KERNEL_OK")
</pallas_src>

<mosaic_0001>
module attributes {stable_mosaic.version = 11 : i64} {
  func.func @forward_kernel(%arg0: i32, %arg1: memref<8x18xf32, #tpu.memory_space<vmem>>, %arg2: memref<18x256xbf16, #tpu.memory_space<vmem>>, %arg3: memref<1x256xf32, #tpu.memory_space<vmem>>, %arg4: memref<256x384xbf16, #tpu.memory_space<vmem>>, %arg5: memref<1x384xf32, #tpu.memory_space<vmem>>, %arg6: memref<384x128xbf16, #tpu.memory_space<vmem>>, %arg7: memref<1x128xf32, #tpu.memory_space<vmem>>, %arg8: memref<128x128xbf16, #tpu.memory_space<vmem>>, %arg9: memref<1x128xf32, #tpu.memory_space<vmem>>, %arg10: memref<8x128xf32, #tpu.memory_space<vmem>>) attributes {dimension_semantics = [#tpu.dimension_semantics<parallel>], iteration_bounds = array<i64: 1>, scalar_prefetch = 0 : i64, scratch_operands = 0 : i64, tpu.core_type = #tpu.core_type<tc>, window_params = [{transform_indices = @transform_0, window_bounds = array<i64: 8, 18>}, {pipeline_mode = #tpu.pipeline_mode<synchronous>, transform_indices = @transform_1, window_bounds = array<i64: 18, 256>}, {pipeline_mode = #tpu.pipeline_mode<synchronous>, transform_indices = @transform_2, window_bounds = array<i64: 1, 256>}, {pipeline_mode = #tpu.pipeline_mode<synchronous>, transform_indices = @transform_3, window_bounds = array<i64: 256, 384>}, {pipeline_mode = #tpu.pipeline_mode<synchronous>, transform_indices = @transform_4, window_bounds = array<i64: 1, 384>}, {pipeline_mode = #tpu.pipeline_mode<synchronous>, transform_indices = @transform_5, window_bounds = array<i64: 384, 128>}, {pipeline_mode = #tpu.pipeline_mode<synchronous>, transform_indices = @transform_6, window_bounds = array<i64: 1, 128>}, {pipeline_mode = #tpu.pipeline_mode<synchronous>, transform_indices = @transform_7, window_bounds = array<i64: 128, 128>}, {pipeline_mode = #tpu.pipeline_mode<synchronous>, transform_indices = @transform_8, window_bounds = array<i64: 1, 128>}, {transform_indices = @transform_9, window_bounds = array<i64: 8, 128>}]} {
    %c0 = arith.constant 0 : index
    %c0_0 = arith.constant 0 : index
    %0 = vector.load %arg1[%c0, %c0_0] : memref<8x18xf32, #tpu.memory_space<vmem>>, vector<8x18xf32>
    %1 = arith.truncf %0 : vector<8x18xf32> to vector<8x18xbf16>
    %c0_1 = arith.constant 0 : index
    %c0_2 = arith.constant 0 : index
    %2 = vector.load %arg2[%c0_1, %c0_2] : memref<18x256xbf16, #tpu.memory_space<vmem>>, vector<18x256xbf16>
    %cst = arith.constant dense<0.000000e+00> : vector<8x256xf32>
    %3 = tpu.matmul %1, %2, %cst {dimension_numbers = #tpu.dot_dimension_numbers<[1], [0], [0], [1], [0, 0, 1, 1], [], []>} : vector<8x18xbf16>, vector<18x256xbf16>, vector<8x256xf32> -> vector<8x256xf32>
    %c0_3 = arith.constant 0 : index
    %c0_4 = arith.constant 0 : index
    %4 = vector.load %arg3[%c0_3, %c0_4] : memref<1x256xf32, #tpu.memory_space<vmem>>, vector<1x256xf32>
    %5 = vector.broadcast %4 : vector<1x256xf32> to vector<8x256xf32>
    %6 = arith.addf %3, %5 : vector<8x256xf32>
    %cst_5 = arith.constant 0.000000e+00 : f32
    %7 = vector.broadcast %cst_5 : f32 to vector<8x256xf32>
    %8 = arith.maximumf %6, %7 : vector<8x256xf32>
    %9 = arith.truncf %8 : vector<8x256xf32> to vector<8x256xbf16>
    %c0_6 = arith.constant 0 : index
    %c0_7 = arith.constant 0 : index
    %10 = vector.load %arg4[%c0_6, %c0_7] : memref<256x384xbf16, #tpu.memory_space<vmem>>, vector<256x384xbf16>
    %cst_8 = arith.constant dense<0.000000e+00> : vector<8x384xf32>
    %11 = tpu.matmul %9, %10, %cst_8 {dimension_numbers = #tpu.dot_dimension_numbers<[1], [0], [0], [1], [0, 0, 1, 1], [], []>} : vector<8x256xbf16>, vector<256x384xbf16>, vector<8x384xf32> -> vector<8x384xf32>
    %c0_9 = arith.constant 0 : index
    %c0_10 = arith.constant 0 : index
    %12 = vector.load %arg5[%c0_9, %c0_10] : memref<1x384xf32, #tpu.memory_space<vmem>>, vector<1x384xf32>
    %13 = vector.broadcast %12 : vector<1x384xf32> to vector<8x384xf32>
    %14 = arith.addf %11, %13 : vector<8x384xf32>
    %cst_11 = arith.constant 0.000000e+00 : f32
    %15 = vector.broadcast %cst_11 : f32 to vector<8x384xf32>
    %16 = arith.maximumf %14, %15 : vector<8x384xf32>
    %17 = arith.truncf %16 : vector<8x384xf32> to vector<8x384xbf16>
    %c0_12 = arith.constant 0 : index
    %c0_13 = arith.constant 0 : index
    %18 = vector.load %arg6[%c0_12, %c0_13] : memref<384x128xbf16, #tpu.memory_space<vmem>>, vector<384x128xbf16>
    %cst_14 = arith.constant dense<0.000000e+00> : vector<8x128xf32>
    %19 = tpu.matmul %17, %18, %cst_14 {dimension_numbers = #tpu.dot_dimension_numbers<[1], [0], [0], [1], [0, 0, 1, 1], [], []>} : vector<8x384xbf16>, vector<384x128xbf16>, vector<8x128xf32> -> vector<8x128xf32>
    %c0_15 = arith.constant 0 : index
    %c0_16 = arith.constant 0 : index
    %20 = vector.load %arg7[%c0_15, %c0_16] : memref<1x128xf32, #tpu.memory_space<vmem>>, vector<1x128xf32>
    %21 = vector.broadcast %20 : vector<1x128xf32> to vector<8x128xf32>
    %22 = arith.addf %19, %21 : vector<8x128xf32>
    %cst_17 = arith.constant 0.000000e+00 : f32
    %23 = vector.broadcast %cst_17 : f32 to vector<8x128xf32>
    %24 = arith.maximumf %22, %23 : vector<8x128xf32>
    %25 = arith.truncf %24 : vector<8x128xf32> to vector<8x128xbf16>
    %c0_18 = arith.constant 0 : index
    %c0_19 = arith.constant 0 : index
    %26 = vector.load %arg8[%c0_18, %c0_19] : memref<128x128xbf16, #tpu.memory_space<vmem>>, vector<128x128xbf16>
    %cst_20 = arith.constant dense<0.000000e+00> : vector<8x128xf32>
    %27 = tpu.matmul %25, %26, %cst_20 {dimension_numbers = #tpu.dot_dimension_numbers<[1], [0], [0], [1], [0, 0, 1, 1], [], []>} : vector<8x128xbf16>, vector<128x128xbf16>, vector<8x128xf32> -> vector<8x128xf32>
    %c0_21 = arith.constant 0 : index
    %c0_22 = arith.constant 0 : index
    %28 = vector.load %arg9[%c0_21, %c0_22] : memref<1x128xf32, #tpu.memory_space<vmem>>, vector<1x128xf32>
    %29 = vector.broadcast %28 : vector<1x128xf32> to vector<8x128xf32>
    %30 = arith.addf %27, %29 : vector<8x128xf32>
    %cst_23 = arith.constant dense<0xFF800000> : vector<8xf32>
    %31 = vector.multi_reduction <maximumf>, %30, %cst_23 [1] : vector<8x128xf32> to vector<8xf32>
    %32 = vector.shape_cast %31 : vector<8xf32> to vector<8x1xf32>
    %33 = vector.broadcast %32 : vector<8x1xf32> to vector<8x128xf32>
    %34 = arith.subf %30, %33 : vector<8x128xf32>
    %35 = math.exp %34 : vector<8x128xf32>
    %cst_24 = arith.constant dense<0.000000e+00> : vector<8xf32>
    %36 = vector.multi_reduction <add>, %35, %cst_24 [1] : vector<8x128xf32> to vector<8xf32>
    %37 = vector.shape_cast %36 : vector<8xf32> to vector<8x1xf32>
    %38 = tpu.reciprocal %37 {approx = true} : vector<8x1xf32> -> vector<8x1xf32>
    %39 = vector.broadcast %38 : vector<8x1xf32> to vector<8x128xf32>
    %40 = arith.mulf %35, %39 : vector<8x128xf32>
    %c0_25 = arith.constant 0 : index
    %c0_26 = arith.constant 0 : index
    %41 = vector.load %arg10[%c0_25, %c0_26] : memref<8x128xf32, #tpu.memory_space<vmem>>, vector<8x128xf32>
    tpu.vector_store %arg10[%c0_25, %c0_26], %40 {strides = array<i32>} : memref<8x128xf32, #tpu.memory_space<vmem>>, vector<8x128xf32>,
    return
  }
  func.func @transform_0(%arg0: i32) -> (i32, i32) {
    %c0_i32 = arith.constant 0 : i32
    %c0_i32_0 = arith.constant 0 : i32
    return %arg0, %c0_i32 : i32, i32
  }
  func.func @transform_1(%arg0: i32) -> (i32, i32) {
    %c0_i32 = arith.constant 0 : i32
    %c0_i32_0 = arith.constant 0 : i32
    %c0_i32_1 = arith.constant 0 : i32
    return %c0_i32, %c0_i32_0 : i32, i32
  }
  func.func @transform_2(%arg0: i32) -> (i32, i32) {
    %c0_i32 = arith.constant 0 : i32
    %c0_i32_0 = arith.constant 0 : i32
    %c0_i32_1 = arith.constant 0 : i32
    return %c0_i32, %c0_i32_0 : i32, i32
  }
  func.func @transform_3(%arg0: i32) -> (i32, i32) {
    %c0_i32 = arith.constant 0 : i32
    %c0_i32_0 = arith.constant 0 : i32
    %c0_i32_1 = arith.constant 0 : i32
    return %c0_i32, %c0_i32_0 : i32, i32
  }
  func.func @transform_4(%arg0: i32) -> (i32, i32) {
    %c0_i32 = arith.constant 0 : i32
    %c0_i32_0 = arith.constant 0 : i32
    %c0_i32_1 = arith.constant 0 : i32
    return %c0_i32, %c0_i32_0 : i32, i32
  }
  func.func @transform_5(%arg0: i32) -> (i32, i32) {
    %c0_i32 = arith.constant 0 : i32
    %c0_i32_0 = arith.constant 0 : i32
    %c0_i32_1 = arith.constant 0 : i32
    return %c0_i32, %c0_i32_0 : i32, i32
  }
  func.func @transform_6(%arg0: i32) -> (i32, i32) {
    %c0_i32 = arith.constant 0 : i32
    %c0_i32_0 = arith.constant 0 : i32
    %c0_i32_1 = arith.constant 0 : i32
    return %c0_i32, %c0_i32_0 : i32, i32
  }
  func.func @transform_7(%arg0: i32) -> (i32, i32) {
    %c0_i32 = arith.constant 0 : i32
    %c0_i32_0 = arith.constant 0 : i32
    %c0_i32_1 = arith.constant 0 : i32
    return %c0_i32, %c0_i32_0 : i32, i32
  }
  func.func @transform_8(%arg0: i32) -> (i32, i32) {
    %c0_i32 = arith.constant 0 : i32
    %c0_i32_0 = arith.constant 0 : i32
    %c0_i32_1 = arith.constant 0 : i32
    return %c0_i32, %c0_i32_0 : i32, i32
  }
  func.func @transform_9(%arg0: i32) -> (i32, i32) {
    %c0_i32 = arith.constant 0 : i32
    %c0_i32_0 = arith.constant 0 : i32
    return %arg0, %c0_i32 : i32, i32
  }
}

</mosaic_0001>

<llo_original>
// kernel: tpu_custom_call.1
$region0: #{tpu_custom_call.1}
  #allocation0 [shape = 'u32[]', space=smem, size = 0x4, offset = 0x4, fixed_abs, tag = 'smem constant byte address 0x4 - core index']
  #allocation1 [shape = 'u32[72,128]{1,0:T(1,128)}', space=vmem, size = 0x9000, scoped, tag = 'internal scratch']
  %s0 = inlined_call_operand.hbm [shape: f32[8,18], index: 0, kind: input, shape index: {}]
  %s1 = inlined_call_operand.hbm [shape: bf16[18,256], index: 1, kind: input, shape index: {}]
  %s2 = inlined_call_operand.hbm [shape: f32[1,256], index: 2, kind: input, shape index: {}]
  %s3 = inlined_call_operand.hbm [shape: bf16[256,384], index: 3, kind: input, shape index: {}]
  %s4 = inlined_call_operand.vmem [shape: f32[1,384], index: 4, kind: input, shape index: {}]
  %s5 = inlined_call_operand.hbm [shape: bf16[384,128], index: 5, kind: input, shape index: {}]
  %s6 = inlined_call_operand.vmem [shape: f32[1,128], index: 6, kind: input, shape index: {}]
  %s7 = inlined_call_operand.hbm [shape: bf16[128,128], index: 7, kind: input, shape index: {}]
  %s8 = inlined_call_operand.vmem [shape: f32[1,128], index: 8, kind: input, shape index: {}]
  %s9 = inlined_call_operand.hbm [shape: f32[8,128], index: 9, kind: output, shape index: {}]
  %s10 = sld [smem:[#allocation0]]
  $region70: #{tpu_custom_call.1} parent=0
    _
  %s12 = ssub.s32 1, %s10
  %s13 = scalar_select 0, %s12, %s10
  $region1: #{tpu_custom_call.1} parent=0
    #allocation2 [shape = 'u8[4096]{0}', space=vmem, size = 0x1000, scoped, tag = 'input window, operand 0, single buffered']
    #allocation3 [shape = 's32[1]{0}', space=sflag, size = 0x4, scoped, tag = 'scoped memory for tpu_custom_call.1']
    #allocation4 [shape = 's32[1]{0}', space=sflag, size = 0x4, scoped, tag = 'scoped memory for tpu_custom_call.1']
    #allocation5 [shape = 'u8[12288]{0}', space=vmem, size = 0x3000, scoped, tag = 'input window, operand 1, single buffered']
    #allocation6 [shape = 's32[1]{0}', space=sflag, size = 0x4, scoped, tag = 'scoped memory for tpu_custom_call.1']
    #allocation7 [shape = 'u8[1024]{0}', space=vmem, size = 0x400, scoped, tag = 'input window, operand 2, single buffered']
    #allocation8 [shape = 'u8[196608]{0}', space=vmem, size = 0x30000, scoped, tag = 'input window, operand 3, single buffered']
    #allocation9 [shape = 's32[1]{0}', space=sflag, size = 0x4, scoped, tag = 'scoped memory for tpu_custom_call.1']
    #allocation10 [shape = 'u8[98304]{0}', space=vmem, size = 0x18000, scoped, tag = 'input window, operand 5, single buffered']
    #allocation11 [shape = 'u8[32768]{0}', space=vmem, size = 0x8000, scoped, tag = 'input window, operand 7, single buffered']
    #allocation12 [shape = 's32[1]{0}', space=sflag, size = 0x4, scoped, tag = 'scoped memory for tpu_custom_call.1']
    #allocation13 [shape = 'u8[4096]{0}', space=vmem, size = 0x1000, scoped, tag = 'output window, operand 0, single buffered']
    %14 = vsyncpa [#allocation3], 0
    %15 = vsyncpa [#allocation6], 0
    %16 = vsyncpa [#allocation9], 0
    %17 = vsyncpa [#allocation12], 0
    %18 = vsyncpa [#allocation4], 0
    // Predicated region
    $region2: #{tpu_custom_call.1} parent=1 // pred_check
      _
    $region3: #{tpu_custom_call.1} parent=1 // pred_check_branch
      %20 = sbr.rel (0) target = $region5
    $region4: #{tpu_custom_call.1} parent=1 // pred_region
      %22 = vsyncadd [#allocation3], 0
      %s24 = sshll.u32 %s0, 4
      %s25 = int_to_ptr.hbm [resolvable:$true] %s24
      %s26 = sshll.u32 [#allocation2], 4
      %s27 = int_to_ptr.vmem [resolvable:$true] %s26
      %29 = dma.hbm_to_vmem [thread:$0]  %s25, 128, %s27, [#allocation3]
    $region5: #{tpu_custom_call.1} parent=1 // pred_fallthru
      _
    // Predicated region
    $region6: #{tpu_custom_call.1} parent=1 // pred_check
      _
    $region7: #{tpu_custom_call.1} parent=1 // pred_check_branch
      %31 = sbr.rel (0) target = $region9
    $region8: #{tpu_custom_call.1} parent=1 // pred_region
      %33 = vsyncadd [#allocation6], 0
      %s34 = sshll.u32 %s1, 4
      %s35 = int_to_ptr.hbm [resolvable:$true] %s34
      %s36 = sshll.u32 [#allocation5], 4
      %s37 = int_to_ptr.vmem [resolvable:$true] %s36
      %42 = dma.hbm_to_vmem [thread:$0]  %s35, 384, %s37, [#allocation6], 128, 128, 8
    $region9: #{tpu_custom_call.1} parent=1 // pred_fallthru
      _
    // Predicated region
    $region10: #{tpu_custom_call.1} parent=1 // pred_check
      _
    $region11: #{tpu_custom_call.1} parent=1 // pred_check_branch
      %44 = sbr.rel (0) target = $region13
    $region12: #{tpu_custom_call.1} parent=1 // pred_region
      %46 = vsyncadd [#allocation6], 0
      %s48 = sshll.u32 %s2, 4
      %s49 = int_to_ptr.hbm [resolvable:$true] %s48
      %s50 = sshll.u32 [#allocation7], 4
      %s51 = int_to_ptr.vmem [resolvable:$true] %s50
      %53 = dma.hbm_to_vmem [thread:$0]  %s49, 32, %s51, [#allocation6]
    $region13: #{tpu_custom_call.1} parent=1 // pred_fallthru
      _
    // Predicated region
    $region14: #{tpu_custom_call.1} parent=1 // pred_check
      _
    $region15: #{tpu_custom_call.1} parent=1 // pred_check_branch
      %55 = sbr.rel (0) target = $region17
    $region16: #{tpu_custom_call.1} parent=1 // pred_region
      %57 = vsyncadd [#allocation9], 0
      %s58 = sshll.u32 %s3, 4
      %s59 = int_to_ptr.hbm [resolvable:$true] %s58
      %s60 = sshll.u32 [#allocation8], 4
      %s61 = int_to_ptr.vmem [resolvable:$true] %s60
      %66 = dma.hbm_to_vmem [thread:$0]  %s59, 6144, %s61, [#allocation9], 192, 192, 12
    $region17: #{tpu_custom_call.1} parent=1 // pred_fallthru
      _
    // Predicated region
    $region18: #{tpu_custom_call.1} parent=1 // pred_check
      _
    $region19: #{tpu_custom_call.1} parent=1 // pred_check_branch
      %68 = sbr.rel (0) target = $region21
    $region20: #{tpu_custom_call.1} parent=1 // pred_region
      _
    $region21: #{tpu_custom_call.1} parent=1 // pred_fallthru
      _
    // Predicated region
    $region22: #{tpu_custom_call.1} parent=1 // pred_check
      _
    $region23: #{tpu_custom_call.1} parent=1 // pred_check_branch
      %70 = sbr.rel (0) target = $region25
    $region24: #{tpu_custom_call.1} parent=1 // pred_region
      %72 = vsyncadd [#allocation9], 0
      %s73 = sshll.u32 %s5, 4
      %s74 = int_to_ptr.hbm [resolvable:$true] %s73
      %s75 = sshll.u32 [#allocation10], 4
      %s76 = int_to_ptr.vmem [resolvable:$true] %s75
      %81 = dma.hbm_to_vmem [thread:$0]  %s74, 3072, %s76, [#allocation9], 64, 64, 4
    $region25: #{tpu_custom_call.1} parent=1 // pred_fallthru
      _
    // Predicated region
    $region26: #{tpu_custom_call.1} parent=1 // pred_check
      _
    $region27: #{tpu_custom_call.1} parent=1 // pred_check_branch
      %83 = sbr.rel (0) target = $region29
    $region28: #{tpu_custom_call.1} parent=1 // pred_region
      _
    $region29: #{tpu_custom_call.1} parent=1 // pred_fallthru
      _
    // Predicated region
    $region30: #{tpu_custom_call.1} parent=1 // pred_check
      _
    $region31: #{tpu_custom_call.1} parent=1 // pred_check_branch
      %85 = sbr.rel (0) target = $region33
    $region32: #{tpu_custom_call.1} parent=1 // pred_region
      %87 = vsyncadd [#allocation12], 0
      %s88 = sshll.u32 %s7, 4
      %s89 = int_to_ptr.hbm [resolvable:$true] %s88
      %s90 = sshll.u32 [#allocation11], 4
      %s91 = int_to_ptr.vmem [resolvable:$true] %s90
      %96 = dma.hbm_to_vmem [thread:$0]  %s89, 1024, %s91, [#allocation12], 64, 64, 4
    $region33: #{tpu_custom_call.1} parent=1 // pred_fallthru
      _
    // Predicated region
    $region34: #{tpu_custom_call.1} parent=1 // pred_check
      _
    $region35: #{tpu_custom_call.1} parent=1 // pred_check_branch
      %98 = sbr.rel (0) target = $region37
    $region36: #{tpu_custom_call.1} parent=1 // pred_region
      _
    $region37: #{tpu_custom_call.1} parent=1 // pred_fallthru
      _
    // Predicated region
    $region38: #{tpu_custom_call.1} parent=1 // pred_check
      _
    $region39: #{tpu_custom_call.1} parent=1 // pred_check_branch
      %100 = sbr.rel (0) target = $region41
    $region40: #{tpu_custom_call.1} parent=1 // pred_region
      %102 = dma.done [#allocation3], 128
    $region41: #{tpu_custom_call.1} parent=1 // pred_fallthru
      _
    // Predicated region
    $region42: #{tpu_custom_call.1} parent=1 // pred_check
      _
    $region43: #{tpu_custom_call.1} parent=1 // pred_check_branch
      %104 = sbr.rel (0) target = $region45
    $region44: #{tpu_custom_call.1} parent=1 // pred_region
      %106 = dma.done [#allocation6], 384
    $region45: #{tpu_custom_call.1} parent=1 // pred_fallthru
      _
    // Predicated region
    $region46: #{tpu_custom_call.1} parent=1 // pred_check
      _
    $region47: #{tpu_custom_call.1} parent=1 // pred_check_branch
      %108 = sbr.rel (0) target = $region49
    $region48: #{tpu_custom_call.1} parent=1 // pred_region
      %110 = dma.done [#allocation6], 32
    $region49: #{tpu_custom_call.1} parent=1 // pred_fallthru
      _
    // Predicated region
    $region50: #{tpu_custom_call.1} parent=1 // pred_check
      _
    $region51: #{tpu_custom_call.1} parent=1 // pred_check_branch
      %112 = sbr.rel (0) target = $region53
    $region52: #{tpu_custom_call.1} parent=1 // pred_region
      %114 = dma.done [#allocation9], 6144
    $region53: #{tpu_custom_call.1} parent=1 // pred_fallthru
      _
    // Predicated region
    $region54: #{tpu_custom_call.1} parent=1 // pred_check
      _
    $region55: #{tpu_custom_call.1} parent=1 // pred_check_branch
      %116 = sbr.rel (0) target = $region57
    $region56: #{tpu_custom_call.1} parent=1 // pred_region
      %118 = dma.done [#allocation9], 3072
    $region57: #{tpu_custom_call.1} parent=1 // pred_fallthru
      _
    // Predicated region
    $region58: #{tpu_custom_call.1} parent=1 // pred_check
      _
    $region59: #{tpu_custom_call.1} parent=1 // pred_check_branch
      %120 = sbr.rel (0) target = $region61
    $region60: #{tpu_custom_call.1} parent=1 // pred_region
      %122 = dma.done [#allocation12], 1024
    $region61: #{tpu_custom_call.1} parent=1 // pred_fallthru
      _
    %v124 = vld [vmem:[#allocation2] sm:$0xff]
    %v125 = vpack.c.bf16 %v124, %v124
    %v126 = vld [vmem:[#allocation5] sm:$0xff]
    %v127 = vld [vmem:[#allocation5 + $0x8] sm:$0xff]
    %v128 = vld [vmem:[#allocation5 + $0x10] sm:$0x11]
    %v129 = vld [vmem:[#allocation7] sm:$0x3]
    %v131 = vperm.slane %v129, 0
    %v132 = vperm.slane %v129, 1
    %v138 = vunpack.c.l.b16 %v126
    %v139 = vunpack.c.h.b16 %v126
    %v140 = vunpack.c.l.b16 %v127
    %v141 = vunpack.c.h.b16 %v127
    %v142 = vunpack.c.l.b16 %v128
    %v143 = vunpack.c.h.b16 %v128
    %v144 = vpack.c.b16 %v140, %v138
    %v145 = vpack.c.b16 %v141, %v139
    %v146 = vpack.c.b16 %v142, %v142
    %v147 = vpack.c.b16 %v143, %v143
    %vm150 = vcmask 146432
    %v152 = vsel %vm150, %v125, 0
    %vm154 = vcmask 1040384
    %v156 = vsel %vm154, %v146, 0
    %v159 = vsel %vm154, %v147, 0
    %161 = vmatpush.bf16.msra.mxu0 0
    %162 = vmatpush.bf16.msra.mxu0 0
    %163 = vmatpush.bf16.msra.mxu0 0
    %164 = vmatpush.bf16.msra.mxu0 0
    %165 = vmatpush.bf16.msra.mxu0 0
    %166 = vmatpush.bf16.msra.mxu0 0
    %167 = vmatpush.bf16.msra.mxu0 %v156
    %168 = vmatpush.bf16.msra.mxu0 %v144
    %169 = vmatmul.bf16.gmra.mxu0 %v152
    %v170 = vpop.f32.mrf.mxu0
    %v171 = vadd.f32 %v131, %v170
    %v172 = vpop.f32.mrf.mxu0
    %173 = vdwg.mxu0
    %174 = vmatpush.bf16.msra.mxu0 0
    %175 = vmatpush.bf16.msra.mxu0 0
    %176 = vmatpush.bf16.msra.mxu0 0
    %177 = vmatpush.bf16.msra.mxu0 0
    %178 = vmatpush.bf16.msra.mxu0 0
    %179 = vmatpush.bf16.msra.mxu0 0
    %180 = vmatpush.bf16.msra.mxu0 %v159
    %181 = vmatpush.bf16.msra.mxu0 %v145
    %182 = vmatmul.bf16.gmra.mxu0 %v152
    %v183 = vpop.f32.mrf.mxu0
    %v184 = vadd.f32 %v132, %v183
    %v185 = vpop.f32.mrf.mxu0
    %186 = vdwg.mxu0
    %v187 = vmax.f32 %v171, 0.0
    %v188 = vmax.f32 %v184, 0.0
    %v189 = vpack.c.bf16 %v187, %v187
    %v190 = vpack.c.bf16 %v188, %v188
    %v191 = vld [vmem:[#allocation8] sm:$0xff]
    %v192 = vld [vmem:[#allocation8 + $0x8] sm:$0xf]
    %v193 = vld [vmem:[#allocation8 + $0xc] sm:$0xff]
    %v194 = vld [vmem:[#allocation8 + $0x14] sm:$0xf]
    %v195 = vld [vmem:[#allocation8 + $0x18] sm:$0xff]
    %v196 = vld [vmem:[#allocation8 + $0x20] sm:$0xf]
    %v197 = vld [vmem:[#allocation8 + $0x24] sm:$0xff]
    %v198 = vld [vmem:[#allocation8 + $0x2c] sm:$0xf]
    %v199 = vld [vmem:[#allocation8 + $0x30] sm:$0xff]
    %v200 = vld [vmem:[#allocation8 + $0x38] sm:$0xf]
    %v201 = vld [vmem:[#allocation8 + $0x3c] sm:$0xff]
    %v202 = vld [vmem:[#allocation8 + $0x44] sm:$0xf]
    %v203 = vld [vmem:[#allocation8 + $0x48] sm:$0xff]
    %v204 = vld [vmem:[#allocation8 + $0x50] sm:$0xf]
    %v205 = vld [vmem:[#allocation8 + $0x54] sm:$0xff]
    %v206 = vld [vmem:[#allocation8 + $0x5c] sm:$0xf]
    %v207 = vld [vmem:[#allocation8 + $0x60] sm:$0xff]
    %v208 = vld [vmem:[#allocation8 + $0x68] sm:$0xf]
    %v209 = vld [vmem:[#allocation8 + $0x6c] sm:$0xff]
    %v210 = vld [vmem:[#allocation8 + $0x74] sm:$0xf]
    %v211 = vld [vmem:[#allocation8 + $0x78] sm:$0xff]
    %v212 = vld [vmem:[#allocation8 + $0x80] sm:$0xf]
    %v213 = vld [vmem:[#allocation8 + $0x84] sm:$0xff]
    %v214 = vld [vmem:[#allocation8 + $0x8c] sm:$0xf]
    %v215 = vld [vmem:[#allocation8 + $0x90] sm:$0xff]
    %v216 = vld [vmem:[#allocation8 + $0x98] sm:$0xf]
    %v217 = vld [vmem:[#allocation8 + $0x9c] sm:$0xff]
    %v218 = vld [vmem:[#allocation8 + $0xa4] sm:$0xf]
    %v219 = vld [vmem:[#allocation8 + $0xa8] sm:$0xff]
    %v220 = vld [vmem:[#allocation8 + $0xb0] sm:$0xf]
    %v221 = vld [vmem:[#allocation8 + $0xb4] sm:$0xff]
    %v222 = vld [vmem:[#allocation8 + $0xbc] sm:$0xf]
    %v223 = vld [vmem:[#allocation8 + $0xc0] sm:$0xff]
    %v224 = vld [vmem:[#allocation8 + $0xc8] sm:$0xf]
    %v225 = vld [vmem:[#allocation8 + $0xcc] sm:$0xff]
    %v226 = vld [vmem:[#allocation8 + $0xd4] sm:$0xf]
    %v227 = vld [vmem:[#allocation8 + $0xd8] sm:$0xff]
    %v228 = vld [vmem:[#allocation8 + $0xe0] sm:$0xf]
    %v229 = vld [vmem:[#allocation8 + $0xe4] sm:$0xff]
    %v230 = vld [vmem:[#allocation8 + $0xec] sm:$0xf]
    %v231 = vld [vmem:[#allocation8 + $0xf0] sm:$0xff]
    %v232 = vld [vmem:[#allocation8 + $0xf8] sm:$0xf]
    %v233 = vld [vmem:[#allocation8 + $0xfc] sm:$0xff]
    %v234 = vld [vmem:[#allocation8 + $0x104] sm:$0xf]
    %v235 = vld [vmem:[#allocation8 + $0x108] sm:$0xff]
    %v236 = vld [vmem:[#allocation8 + $0x110] sm:$0xf]
    %v237 = vld [vmem:[#allocation8 + $0x114] sm:$0xff]
    %v238 = vld [vmem:[#allocation8 + $0x11c] sm:$0xf]
    %v239 = vld [vmem:[#allocation8 + $0x120] sm:$0xff]
    %v240 = vld [vmem:[#allocation8 + $0x128] sm:$0xf]
    %v241 = vld [vmem:[#allocation8 + $0x12c] sm:$0xff]
    %v242 = vld [vmem:[#allocation8 + $0x134] sm:$0xf]
    %v243 = vld [vmem:[#allocation8 + $0x138] sm:$0xff]
    %v244 = vld [vmem:[#allocation8 + $0x140] sm:$0xf]
    %v245 = vld [vmem:[#allocation8 + $0x144] sm:$0xff]
    %v246 = vld [vmem:[#allocation8 + $0x14c] sm:$0xf]
    %v247 = vld [vmem:[#allocation8 + $0x150] sm:$0xff]
    %v248 = vld [vmem:[#allocation8 + $0x158] sm:$0xf]
    %v249 = vld [vmem:[#allocation8 + $0x15c] sm:$0xff]
    %v250 = vld [vmem:[#allocation8 + $0x164] sm:$0xf]
    %v251 = vld [vmem:[#allocation8 + $0x168] sm:$0xff]
    %v252 = vld [vmem:[#allocation8 + $0x170] sm:$0xf]
    %v253 = vld [vmem:[#allocation8 + $0x174] sm:$0xff]
    %v254 = vld [vmem:[#allocation8 + $0x17c] sm:$0xf]
    %v255 = vld [vmem:[%s4] sm:$0x7]
    %v257 = vperm.slane %v255, 0
    %v258 = vperm.slane %v255, 1
    %v259 = vperm.slane %v255, 2
    %v327 = vunpack.c.l.b16 %v191
    %v328 = vunpack.c.h.b16 %v191
    %v329 = vunpack.c.l.b16 %v192
    %v330 = vunpack.c.l.b16 %v193
    %v331 = vunpack.c.h.b16 %v193
    %v332 = vunpack.c.l.b16 %v194
    %v333 = vunpack.c.l.b16 %v195
    %v334 = vunpack.c.h.b16 %v195
    %v335 = vunpack.c.l.b16 %v196
    %v336 = vunpack.c.l.b16 %v197
    %v337 = vunpack.c.h.b16 %v197
    %v338 = vunpack.c.l.b16 %v198
    %v339 = vunpack.c.l.b16 %v199
    %v340 = vunpack.c.h.b16 %v199
    %v341 = vunpack.c.l.b16 %v200
    %v342 = vunpack.c.l.b16 %v201
    %v343 = vunpack.c.h.b16 %v201
    %v344 = vunpack.c.l.b16 %v202
    %v345 = vunpack.c.l.b16 %v203
    %v346 = vunpack.c.h.b16 %v203
    %v347 = vunpack.c.l.b16 %v204
    %v348 = vunpack.c.l.b16 %v205
    %v349 = vunpack.c.h.b16 %v205
    %v350 = vunpack.c.l.b16 %v206
    %v351 = vunpack.c.l.b16 %v207
    %v352 = vunpack.c.h.b16 %v207
    %v353 = vunpack.c.l.b16 %v208
    %v354 = vunpack.c.l.b16 %v209
    %v355 = vunpack.c.h.b16 %v209
    %v356 = vunpack.c.l.b16 %v210
    %v357 = vunpack.c.l.b16 %v211
    %v358 = vunpack.c.h.b16 %v211
    %v359 = vunpack.c.l.b16 %v212
    %v360 = vunpack.c.l.b16 %v213
    %v361 = vunpack.c.h.b16 %v213
    %v362 = vunpack.c.l.b16 %v214
    %v363 = vunpack.c.l.b16 %v215
    %v364 = vunpack.c.h.b16 %v215
    %v365 = vunpack.c.l.b16 %v216
    %v366 = vunpack.c.l.b16 %v217
    %v367 = vunpack.c.h.b16 %v217
    %v368 = vunpack.c.l.b16 %v218
    %v369 = vunpack.c.l.b16 %v219
    %v370 = vunpack.c.h.b16 %v219
    %v371 = vunpack.c.l.b16 %v220
    %v372 = vunpack.c.l.b16 %v221
    %v373 = vunpack.c.h.b16 %v221
    %v374 = vunpack.c.l.b16 %v222
    %v375 = vunpack.c.l.b16 %v223
    %v376 = vunpack.c.h.b16 %v223
    %v377 = vunpack.c.l.b16 %v224
    %v378 = vunpack.c.l.b16 %v225
    %v379 = vunpack.c.h.b16 %v225
    %v380 = vunpack.c.l.b16 %v226
    %v381 = vunpack.c.l.b16 %v227
    %v382 = vunpack.c.h.b16 %v227
    %v383 = vunpack.c.l.b16 %v228
    %v384 = vunpack.c.l.b16 %v229
    %v385 = vunpack.c.h.b16 %v229
    %v386 = vunpack.c.l.b16 %v230
    %v387 = vunpack.c.l.b16 %v231
    %v388 = vunpack.c.h.b16 %v231
    %v389 = vunpack.c.l.b16 %v232
    %v390 = vunpack.c.l.b16 %v233
    %v391 = vunpack.c.h.b16 %v233
    %v392 = vunpack.c.l.b16 %v234
    %v393 = vunpack.c.l.b16 %v235
    %v394 = vunpack.c.h.b16 %v235
    %v395 = vunpack.c.l.b16 %v236
    %v396 = vunpack.c.l.b16 %v237
    %v397 = vunpack.c.h.b16 %v237
    %v398 = vunpack.c.l.b16 %v238
    %v399 = vunpack.c.l.b16 %v239
    %v400 = vunpack.c.h.b16 %v239
    %v401 = vunpack.c.l.b16 %v240
    %v402 = vunpack.c.l.b16 %v241
    %v403 = vunpack.c.h.b16 %v241
    %v404 = vunpack.c.l.b16 %v242
    %v405 = vunpack.c.l.b16 %v243
    %v406 = vunpack.c.h.b16 %v243
    %v407 = vunpack.c.l.b16 %v244
    %v408 = vunpack.c.l.b16 %v245
    %v409 = vunpack.c.h.b16 %v245
    %v410 = vunpack.c.l.b16 %v246
    %v411 = vunpack.c.l.b16 %v247
    %v412 = vunpack.c.h.b16 %v247
    %v413 = vunpack.c.l.b16 %v248
    %v414 = vunpack.c.l.b16 %v249
    %v415 = vunpack.c.h.b16 %v249
    %v416 = vunpack.c.l.b16 %v250
    %v417 = vunpack.c.l.b16 %v251
    %v418 = vunpack.c.h.b16 %v251
    %v419 = vunpack.c.l.b16 %v252
    %v420 = vunpack.c.l.b16 %v253
    %v421 = vunpack.c.h.b16 %v253
    %v422 = vunpack.c.l.b16 %v254
    %v423 = vpack.c.b16 %v330, %v327
    %v424 = vpack.c.b16 %v331, %v328
    %v425 = vpack.c.b16 %v332, %v329
    %v426 = vpack.c.b16 %v336, %v333
    %v427 = vpack.c.b16 %v337, %v334
    %v428 = vpack.c.b16 %v338, %v335
    %v429 = vpack.c.b16 %v342, %v339
    %v430 = vpack.c.b16 %v343, %v340
    %v431 = vpack.c.b16 %v344, %v341
    %v432 = vpack.c.b16 %v348, %v345
    %v433 = vpack.c.b16 %v349, %v346
    %v434 = vpack.c.b16 %v350, %v347
    %v435 = vpack.c.b16 %v354, %v351
    %v436 = vpack.c.b16 %v355, %v352
    %v437 = vpack.c.b16 %v356, %v353
    %v438 = vpack.c.b16 %v360, %v357
    %v439 = vpack.c.b16 %v361, %v358
    %v440 = vpack.c.b16 %v362, %v359
    %v441 = vpack.c.b16 %v366, %v363
    %v442 = vpack.c.b16 %v367, %v364
    %v443 = vpack.c.b16 %v368, %v365
    %v444 = vpack.c.b16 %v372, %v369
    %v445 = vpack.c.b16 %v373, %v370
    %v446 = vpack.c.b16 %v374, %v371
    %v447 = vpack.c.b16 %v378, %v375
    %v448 = vpack.c.b16 %v379, %v376
    %v449 = vpack.c.b16 %v380, %v377
    %v450 = vpack.c.b16 %v384, %v381
    %v451 = vpack.c.b16 %v385, %v382
    %v452 = vpack.c.b16 %v386, %v383
    %v453 = vpack.c.b16 %v390, %v387
    %v454 = vpack.c.b16 %v391, %v388
    %v455 = vpack.c.b16 %v392, %v389
    %v456 = vpack.c.b16 %v396, %v393
    %v457 = vpack.c.b16 %v397, %v394
    %v458 = vpack.c.b16 %v398, %v395
    %v459 = vpack.c.b16 %v402, %v399
    %v460 = vpack.c.b16 %v403, %v400
    %v461 = vpack.c.b16 %v404, %v401
    %v462 = vpack.c.b16 %v408, %v405
    %v463 = vpack.c.b16 %v409, %v406
    %v464 = vpack.c.b16 %v410, %v407
    %v465 = vpack.c.b16 %v414, %v411
    %v466 = vpack.c.b16 %v415, %v412
    %v467 = vpack.c.b16 %v416, %v413
    %v468 = vpack.c.b16 %v420, %v417
    %v469 = vpack.c.b16 %v421, %v418
    %v470 = vpack.c.b16 %v422, %v419
    %519 = vmatpush.bf16.msra.mxu0 %v444
    %520 = vmatpush.bf16.msra.mxu0 %v441
    %521 = vmatpush.bf16.msra.mxu0 %v438
    %522 = vmatpush.bf16.msra.mxu0 %v435
    %523 = vmatpush.bf16.msra.mxu0 %v432
    %524 = vmatpush.bf16.msra.mxu0 %v429
    %525 = vmatpush.bf16.msra.mxu0 %v426
    %526 = vmatpush.bf16.msra.mxu0 %v423
    %527 = vmatmul.bf16.gmra.mxu0 %v189
    %v528 = vpop.f32.mrf.mxu0
    %v529 = vadd.f32 %v257, %v528
    %v530 = vpop.f32.mrf.mxu0
    %531 = vdwg.mxu0
    %532 = vmatpush.bf16.msra.mxu0 %v468
    %533 = vmatpush.bf16.msra.mxu0 %v465
    %534 = vmatpush.bf16.msra.mxu0 %v462
    %535 = vmatpush.bf16.msra.mxu0 %v459
    %536 = vmatpush.bf16.msra.mxu0 %v456
    %537 = vmatpush.bf16.msra.mxu0 %v453
    %538 = vmatpush.bf16.msra.mxu0 %v450
    %539 = vmatpush.bf16.msra.mxu0 %v447
    %540 = vmatmul.bf16.gmra.mxu0 %v190
    %v541 = vpop.f32.mrf.mxu0
    %v542 = vadd.f32 %v529, %v541
    %v543 = vpop.f32.mrf.mxu0
    %544 = vdwg.mxu0
    %545 = vmatpush.bf16.msra.mxu0 %v445
    %546 = vmatpush.bf16.msra.mxu0 %v442
    %547 = vmatpush.bf16.msra.mxu0 %v439
    %548 = vmatpush.bf16.msra.mxu0 %v436
    %549 = vmatpush.bf16.msra.mxu0 %v433
    %550 = vmatpush.bf16.msra.mxu0 %v430
    %551 = vmatpush.bf16.msra.mxu0 %v427
    %552 = vmatpush.bf16.msra.mxu0 %v424
    %553 = vmatmul.bf16.gmra.mxu0 %v189
    %v554 = vpop.f32.mrf.mxu0
    %v555 = vadd.f32 %v258, %v554
    %v556 = vpop.f32.mrf.mxu0
    %557 = vdwg.mxu0
    %558 = vmatpush.bf16.msra.mxu0 %v469
    %559 = vmatpush.bf16.msra.mxu0 %v466
    %560 = vmatpush.bf16.msra.mxu0 %v463
    %561 = vmatpush.bf16.msra.mxu0 %v460
    %562 = vmatpush.bf16.msra.mxu0 %v457
    %563 = vmatpush.bf16.msra.mxu0 %v454
    %564 = vmatpush.bf16.msra.mxu0 %v451
    %565 = vmatpush.bf16.msra.mxu0 %v448
    %566 = vmatmul.bf16.gmra.mxu0 %v190
    %v567 = vpop.f32.mrf.mxu0
    %v568 = vadd.f32 %v555, %v567
    %v569 = vpop.f32.mrf.mxu0
    %570 = vdwg.mxu0
    %571 = vmatpush.bf16.msra.mxu0 %v446
    %572 = vmatpush.bf16.msra.mxu0 %v443
    %573 = vmatpush.bf16.msra.mxu0 %v440
    %574 = vmatpush.bf16.msra.mxu0 %v437
    %575 = vmatpush.bf16.msra.mxu0 %v434
    %576 = vmatpush.bf16.msra.mxu0 %v431
    %577 = vmatpush.bf16.msra.mxu0 %v428
    %578 = vmatpush.bf16.msra.mxu0 %v425
    %579 = vmatmul.bf16.gmra.mxu0 %v189
    %v580 = vpop.f32.mrf.mxu0
    %v581 = vadd.f32 %v259, %v580
    %v582 = vpop.f32.mrf.mxu0
    %583 = vdwg.mxu0
    %584 = vmatpush.bf16.msra.mxu0 %v470
    %585 = vmatpush.bf16.msra.mxu0 %v467
    %586 = vmatpush.bf16.msra.mxu0 %v464
    %587 = vmatpush.bf16.msra.mxu0 %v461
    %588 = vmatpush.bf16.msra.mxu0 %v458
    %589 = vmatpush.bf16.msra.mxu0 %v455
    %590 = vmatpush.bf16.msra.mxu0 %v452
    %591 = vmatpush.bf16.msra.mxu0 %v449
    %592 = vmatmul.bf16.gmra.mxu0 %v190
    %v593 = vpop.f32.mrf.mxu0
    %v594 = vadd.f32 %v581, %v593
    %v595 = vpop.f32.mrf.mxu0
    %596 = vdwg.mxu0
    %v597 = vmax.f32 %v542, 0.0
    %v598 = vmax.f32 %v568, 0.0
    %v599 = vmax.f32 %v594, 0.0
    %v600 = vpack.c.bf16 %v597, %v597
    %v601 = vpack.c.bf16 %v598, %v598
    %v602 = vpack.c.bf16 %v599, %v599
    %v603 = vld [vmem:[#allocation10] sm:$0xf]
    %v604 = vld [vmem:[#allocation10 + $0x4] sm:$0xf]
    %v605 = vld [vmem:[#allocation10 + $0x8] sm:$0xf]
    %v606 = vld [vmem:[#allocation10 + $0xc] sm:$0xf]
    %v607 = vld [vmem:[#allocation10 + $0x10] sm:$0xf]
    %v608 = vld [vmem:[#allocation10 + $0x14] sm:$0xf]
    %v609 = vld [vmem:[#allocation10 + $0x18] sm:$0xf]
    %v610 = vld [vmem:[#allocation10 + $0x1c] sm:$0xf]
    %v611 = vld [vmem:[#allocation10 + $0x20] sm:$0xf]
    %v612 = vld [vmem:[#allocation10 + $0x24] sm:$0xf]
    %v613 = vld [vmem:[#allocation10 + $0x28] sm:$0xf]
    %v614 = vld [vmem:[#allocation10 + $0x2c] sm:$0xf]
    %v615 = vld [vmem:[#allocation10 + $0x30] sm:$0xf]
    %v616 = vld [vmem:[#allocation10 + $0x34] sm:$0xf]
    %v617 = vld [vmem:[#allocation10 + $0x38] sm:$0xf]
    %v618 = vld [vmem:[#allocation10 + $0x3c] sm:$0xf]
    %v619 = vld [vmem:[#allocation10 + $0x40] sm:$0xf]
    %v620 = vld [vmem:[#allocation10 + $0x44] sm:$0xf]
    %v621 = vld [vmem:[#allocation10 + $0x48] sm:$0xf]
    %v622 = vld [vmem:[#allocation10 + $0x4c] sm:$0xf]
    %v623 = vld [vmem:[#allocation10 + $0x50] sm:$0xf]
    %v624 = vld [vmem:[#allocation10 + $0x54] sm:$0xf]
    %v625 = vld [vmem:[#allocation10 + $0x58] sm:$0xf]
    %v626 = vld [vmem:[#allocation10 + $0x5c] sm:$0xf]
    %v627 = vld [vmem:[#allocation10 + $0x60] sm:$0xf]
    %v628 = vld [vmem:[#allocation10 + $0x64] sm:$0xf]
    %v629 = vld [vmem:[#allocation10 + $0x68] sm:$0xf]
    %v630 = vld [vmem:[#allocation10 + $0x6c] sm:$0xf]
    %v631 = vld [vmem:[#allocation10 + $0x70] sm:$0xf]
    %v632 = vld [vmem:[#allocation10 + $0x74] sm:$0xf]
    %v633 = vld [vmem:[#allocation10 + $0x78] sm:$0xf]
    %v634 = vld [vmem:[#allocation10 + $0x7c] sm:$0xf]
    %v635 = vld [vmem:[#allocation10 + $0x80] sm:$0xf]
    %v636 = vld [vmem:[#allocation10 + $0x84] sm:$0xf]
    %v637 = vld [vmem:[#allocation10 + $0x88] sm:$0xf]
    %v638 = vld [vmem:[#allocation10 + $0x8c] sm:$0xf]
    %v639 = vld [vmem:[#allocation10 + $0x90] sm:$0xf]
    %v640 = vld [vmem:[#allocation10 + $0x94] sm:$0xf]
    %v641 = vld [vmem:[#allocation10 + $0x98] sm:$0xf]
    %v642 = vld [vmem:[#allocation10 + $0x9c] sm:$0xf]
    %v643 = vld [vmem:[#allocation10 + $0xa0] sm:$0xf]
    %v644 = vld [vmem:[#allocation10 + $0xa4] sm:$0xf]
    %v645 = vld [vmem:[#allocation10 + $0xa8] sm:$0xf]
    %v646 = vld [vmem:[#allocation10 + $0xac] sm:$0xf]
    %v647 = vld [vmem:[#allocation10 + $0xb0] sm:$0xf]
    %v648 = vld [vmem:[#allocation10 + $0xb4] sm:$0xf]
    %v649 = vld [vmem:[#allocation10 + $0xb8] sm:$0xf]
    %v650 = vld [vmem:[#allocation10 + $0xbc] sm:$0xf]
    %v651 = vld [vmem:[%s6] sm:$0x1]
    %v653 = vperm.slane %v651, 0
    %v703 = vunpack.c.l.b16 %v603
    %v704 = vunpack.c.l.b16 %v604
    %v705 = vunpack.c.l.b16 %v605
    %v706 = vunpack.c.l.b16 %v606
    %v707 = vunpack.c.l.b16 %v607
    %v708 = vunpack.c.l.b16 %v608
    %v709 = vunpack.c.l.b16 %v609
    %v710 = vunpack.c.l.b16 %v610
    %v711 = vunpack.c.l.b16 %v611
    %v712 = vunpack.c.l.b16 %v612
    %v713 = vunpack.c.l.b16 %v613
    %v714 = vunpack.c.l.b16 %v614
    %v715 = vunpack.c.l.b16 %v615
    %v716 = vunpack.c.l.b16 %v616
    %v717 = vunpack.c.l.b16 %v617
    %v718 = vunpack.c.l.b16 %v618
    %v719 = vunpack.c.l.b16 %v619
    %v720 = vunpack.c.l.b16 %v620
    %v721 = vunpack.c.l.b16 %v621
    %v722 = vunpack.c.l.b16 %v622
    %v723 = vunpack.c.l.b16 %v623
    %v724 = vunpack.c.l.b16 %v624
    %v725 = vunpack.c.l.b16 %v625
    %v726 = vunpack.c.l.b16 %v626
    %v727 = vunpack.c.l.b16 %v627
    %v728 = vunpack.c.l.b16 %v628
    %v729 = vunpack.c.l.b16 %v629
    %v730 = vunpack.c.l.b16 %v630
    %v731 = vunpack.c.l.b16 %v631
    %v732 = vunpack.c.l.b16 %v632
    %v733 = vunpack.c.l.b16 %v633
    %v734 = vunpack.c.l.b16 %v634
    %v735 = vunpack.c.l.b16 %v635
    %v736 = vunpack.c.l.b16 %v636
    %v737 = vunpack.c.l.b16 %v637
    %v738 = vunpack.c.l.b16 %v638
    %v739 = vunpack.c.l.b16 %v639
    %v740 = vunpack.c.l.b16 %v640
    %v741 = vunpack.c.l.b16 %v641
    %v742 = vunpack.c.l.b16 %v642
    %v743 = vunpack.c.l.b16 %v643
    %v744 = vunpack.c.l.b16 %v644
    %v745 = vunpack.c.l.b16 %v645
    %v746 = vunpack.c.l.b16 %v646
    %v747 = vunpack.c.l.b16 %v647
    %v748 = vunpack.c.l.b16 %v648
    %v749 = vunpack.c.l.b16 %v649
    %v750 = vunpack.c.l.b16 %v650
    %v751 = vpack.c.b16 %v704, %v703
    %v752 = vpack.c.b16 %v706, %v705
    %v753 = vpack.c.b16 %v708, %v707
    %v754 = vpack.c.b16 %v710, %v709
    %v755 = vpack.c.b16 %v712, %v711
    %v756 = vpack.c.b16 %v714, %v713
    %v757 = vpack.c.b16 %v716, %v715
    %v758 = vpack.c.b16 %v718, %v717
    %v759 = vpack.c.b16 %v720, %v719
    %v760 = vpack.c.b16 %v722, %v721
    %v761 = vpack.c.b16 %v724, %v723
    %v762 = vpack.c.b16 %v726, %v725
    %v763 = vpack.c.b16 %v728, %v727
    %v764 = vpack.c.b16 %v730, %v729
    %v765 = vpack.c.b16 %v732, %v731
    %v766 = vpack.c.b16 %v734, %v733
    %v767 = vpack.c.b16 %v736, %v735
    %v768 = vpack.c.b16 %v738, %v737
    %v769 = vpack.c.b16 %v740, %v739
    %v770 = vpack.c.b16 %v742, %v741
    %v771 = vpack.c.b16 %v744, %v743
    %v772 = vpack.c.b16 %v746, %v745
    %v773 = vpack.c.b16 %v748, %v747
    %v774 = vpack.c.b16 %v750, %v749
    %799 = vmatpush.bf16.msra.mxu0 %v758
    %800 = vmatpush.bf16.msra.mxu0 %v757
    %801 = vmatpush.bf16.msra.mxu0 %v756
    %802 = vmatpush.bf16.msra.mxu0 %v755
    %803 = vmatpush.bf16.msra.mxu0 %v754
    %804 = vmatpush.bf16.msra.mxu0 %v753
    %805 = vmatpush.bf16.msra.mxu0 %v752
    %806 = vmatpush.bf16.msra.mxu0 %v751
    %807 = vmatmul.bf16.gmra.mxu0 %v600
    %v808 = vpop.f32.mrf.mxu0
    %v809 = vadd.f32 %v653, %v808
    %v810 = vpop.f32.mrf.mxu0
    %811 = vdwg.mxu0
    %812 = vmatpush.bf16.msra.mxu0 %v766
    %813 = vmatpush.bf16.msra.mxu0 %v765
    %814 = vmatpush.bf16.msra.mxu0 %v764
    %815 = vmatpush.bf16.msra.mxu0 %v763
    %816 = vmatpush.bf16.msra.mxu0 %v762
    %817 = vmatpush.bf16.msra.mxu0 %v761
    %818 = vmatpush.bf16.msra.mxu0 %v760
    %819 = vmatpush.bf16.msra.mxu0 %v759
    %820 = vmatmul.bf16.gmra.mxu0 %v601
    %v821 = vpop.f32.mrf.mxu0
    %v822 = vadd.f32 %v809, %v821
    %v823 = vpop.f32.mrf.mxu0
    %824 = vdwg.mxu0
    %825 = vmatpush.bf16.msra.mxu0 %v774
    %826 = vmatpush.bf16.msra.mxu0 %v773
    %827 = vmatpush.bf16.msra.mxu0 %v772
    %828 = vmatpush.bf16.msra.mxu0 %v771
    %829 = vmatpush.bf16.msra.mxu0 %v770
    %830 = vmatpush.bf16.msra.mxu0 %v769
    %831 = vmatpush.bf16.msra.mxu0 %v768
    %832 = vmatpush.bf16.msra.mxu0 %v767
    %833 = vmatmul.bf16.gmra.mxu0 %v602
    %v834 = vpop.f32.mrf.mxu0
    %v835 = vadd.f32 %v822, %v834
    %v836 = vpop.f32.mrf.mxu0
    %837 = vdwg.mxu0
    %v838 = vmax.f32 %v835, 0.0
    %v839 = vpack.c.bf16 %v838, %v838
    %v840 = vld [vmem:[#allocation11] sm:$0xf]
    %v841 = vld [vmem:[#allocation11 + $0x4] sm:$0xf]
    %v842 = vld [vmem:[#allocation11 + $0x8] sm:$0xf]
    %v843 = vld [vmem:[#allocation11 + $0xc] sm:$0xf]
    %v844 = vld [vmem:[#allocation11 + $0x10] sm:$0xf]
    %v845 = vld [vmem:[#allocation11 + $0x14] sm:$0xf]
    %v846 = vld [vmem:[#allocation11 + $0x18] sm:$0xf]
    %v847 = vld [vmem:[#allocation11 + $0x1c] sm:$0xf]
    %v848 = vld [vmem:[#allocation11 + $0x20] sm:$0xf]
    %v849 = vld [vmem:[#allocation11 + $0x24] sm:$0xf]
    %v850 = vld [vmem:[#allocation11 + $0x28] sm:$0xf]
    %v851 = vld [vmem:[#allocation11 + $0x2c] sm:$0xf]
    %v852 = vld [vmem:[#allocation11 + $0x30] sm:$0xf]
    %v853 = vld [vmem:[#allocation11 + $0x34] sm:$0xf]
    %v854 = vld [vmem:[#allocation11 + $0x38] sm:$0xf]
    %v855 = vld [vmem:[#allocation11 + $0x3c] sm:$0xf]
    %v856 = vld [vmem:[%s8] sm:$0x1]
    %v858 = vperm.slane %v856, 0
    %v876 = vunpack.c.l.b16 %v840
    %v877 = vunpack.c.l.b16 %v841
    %v878 = vunpack.c.l.b16 %v842
    %v879 = vunpack.c.l.b16 %v843
    %v880 = vunpack.c.l.b16 %v844
    %v881 = vunpack.c.l.b16 %v845
    %v882 = vunpack.c.l.b16 %v846
    %v883 = vunpack.c.l.b16 %v847
    %v884 = vunpack.c.l.b16 %v848
    %v885 = vunpack.c.l.b16 %v849
    %v886 = vunpack.c.l.b16 %v850
    %v887 = vunpack.c.l.b16 %v851
    %v888 = vunpack.c.l.b16 %v852
    %v889 = vunpack.c.l.b16 %v853
    %v890 = vunpack.c.l.b16 %v854
    %v891 = vunpack.c.l.b16 %v855
    %v892 = vpack.c.b16 %v877, %v876
    %v893 = vpack.c.b16 %v879, %v878
    %v894 = vpack.c.b16 %v881, %v880
    %v895 = vpack.c.b16 %v883, %v882
    %v896 = vpack.c.b16 %v885, %v884
    %v897 = vpack.c.b16 %v887, %v886
    %v898 = vpack.c.b16 %v889, %v888
    %v899 = vpack.c.b16 %v891, %v890
    %908 = vmatpush.bf16.msra.mxu0 %v899
    %909 = vmatpush.bf16.msra.mxu0 %v898
    %910 = vmatpush.bf16.msra.mxu0 %v897
    %911 = vmatpush.bf16.msra.mxu0 %v896
    %912 = vmatpush.bf16.msra.mxu0 %v895
    %913 = vmatpush.bf16.msra.mxu0 %v894
    %914 = vmatpush.bf16.msra.mxu0 %v893
    %915 = vmatpush.bf16.msra.mxu0 %v892
    %916 = vmatmul.bf16.gmra.mxu0 %v839
    %v917 = vpop.f32.mrf.mxu0
    %v918 = vadd.f32 %v858, %v917
    %v919 = vpop.f32.mrf.mxu0
    %920 = vdwg.mxu0
    %921 = vmax.xlane.f32.xlu0 %v918
    %v922 = vpop.xlane.xlu0 %921
    %v923 = vsub.f32 %v918, %v922
    %v924 = vmul.f32 %v923, 1.442695
    %v925 = vpow.pop %v924
    %926 = vadd.xlane.f32.xlu0 %v925
    %v927 = vpop.xlane.xlu0 %926
    %v928 = vrcp.pop %v927
    %v929 = vmul.f32 %v925, %v928
    %930 = vst [vmem:[#allocation13] sm:$0xff] %v929
    // Predicated region
    $region62: #{tpu_custom_call.1} parent=1 // pred_check
      _
    $region63: #{tpu_custom_call.1} parent=1 // pred_check_branch
      %932 = sbr.rel (0) target = $region65
    $region64: #{tpu_custom_call.1} parent=1 // pred_region
      %934 = vsyncadd [#allocation4], 0
      %s936 = sshll.u32 [#allocation13], 4
      %s937 = int_to_ptr.vmem [resolvable:$true] %s936
      %s938 = sshll.u32 %s9, 4
      %s939 = int_to_ptr.hbm [resolvable:$true] %s938
      %941 = dma.vmem_to_hbm [thread:$0]  %s937, 128, %s939, [#allocation4]
    $region65: #{tpu_custom_call.1} parent=1 // pred_fallthru
      _
    // Predicated region
    $region66: #{tpu_custom_call.1} parent=1 // pred_check
      _
    $region67: #{tpu_custom_call.1} parent=1 // pred_check_branch
      %943 = sbr.rel (0) target = $region69
    $region68: #{tpu_custom_call.1} parent=1 // pred_region
      %945 = dma.done [#allocation4], 128
    $region69: #{tpu_custom_call.1} parent=1 // pred_fallthru
      _
    %946 = vsyncpa [#allocation3], 1
    %947 = vsyncpa [#allocation6], 1
    %948 = vsyncpa [#allocation9], 1
    %949 = vsyncpa [#allocation12], 1
    %950 = vsyncpa [#allocation4], 1

</llo_original>
